<compile_context>
chip_gen: v5e
topology: v5e:2x2
jax: 0.10.0
libtpu: 0.0.40
codegen_flags: <defaults>
</compile_context>

<pallas_src>
import functools
import math

import jax
import jax.numpy as jnp
from jax import lax
from jax.experimental import pallas as pl
from jax.experimental.pallas import tpu as pltpu


def _sdpa_body(q_ref, k_ref, v_ref, mask_ref, out_ref, attn_ref, *, scale):
    # Blocks: q (1, TQ, Dk), k (1, Lk, Dk), v (1, Lk, Dv), mask (1, TQ, Lk) i8.
    q = q_ref[0]
    k = k_ref[0]
    v = v_ref[0]

    # Fold 1/sqrt(d_k) into q: TQ*Dk VPU multiplies instead of TQ*Lk.
    qs = q * jnp.asarray(scale, dtype=q.dtype)

    # scores = q @ k^T, contracting the last dim of both operands so the MXU
    # consumes K in its stored layout (no XLU transpose / extra VMEM copy).
    scores = lax.dot_general(
        qs,
        k,
        dimension_numbers=(((1,), (1,)), ((), ())),
        preferred_element_type=jnp.float32,
    )  # (TQ, Lk) f32

    if mask_ref is not None:
        # masked_fill_(attn_mask, -inf). Fully-masked rows produce NaN, exactly
        # like torch's softmax over an all--inf row.
        scores = jnp.where(mask_ref[0] != 0, -jnp.inf, scores)

    # Numerically stable softmax over the last dim (f32 math).
    m = jnp.max(scores, axis=-1, keepdims=True)
    p = jnp.exp(scores - m)
    denom = jnp.sum(p, axis=-1, keepdims=True)
    r = pl.reciprocal(denom, approx=True)   # EUP vrcp, separate VLIW slot
    r = r * (2.0 - denom * r)               # one Newton step -> ~exact 1/denom
    attn = p * r

    # dropout: identity (eval / inference mode)
    # TODO(synk): training-mode stochastic dropout not implemented.

    # outputs = attn @ v; cast probabilities to v.dtype so bf16 inputs hit the
    # MXU natively (f32 accumulation).
    out = jnp.dot(attn.astype(v.dtype), v, preferred_element_type=jnp.float32)

    out_ref[0] = out.astype(out_ref.dtype)
    attn_ref[0] = attn.astype(attn_ref.dtype)


def _sdpa_kernel_masked(q_ref, k_ref, v_ref, mask_ref, out_ref, attn_ref, *, scale):
    _sdpa_body(q_ref, k_ref, v_ref, mask_ref, out_ref, attn_ref, scale=scale)


def _sdpa_kernel_nomask(q_ref, k_ref, v_ref, out_ref, attn_ref, *, scale):
    _sdpa_body(q_ref, k_ref, v_ref, None, out_ref, attn_ref, scale=scale)


def _pick_tq(Lq, Lk, Dk, Dv, itemsize, requested=None, budget_bytes=12 << 20):
    """Pick a q-tile size (multiple of 8, divides Lq) whose double-buffered
    per-step VMEM footprint fits a budget safe for v5e/v6e/v7x scoped VMEM."""
    candidates = [512, 256, 128, 64, 32, 16, 8]
    if requested is not None:
        candidates = [requested] + [c for c in candidates if c < requested]
    for tq in candidates:
        if Lq % tq != 0:
            continue
        per_step = (
            tq * Dk * itemsize        # q tile
            + Lk * Dk * itemsize      # k (resident)
            + Lk * Dv * itemsize      # v (resident)
            + tq * Lk * 1             # int8 mask tile
            + tq * Dv * itemsize      # out tile
            + tq * Lk * itemsize      # attn tile (input dtype)
        )
        if 2 * per_step <= budget_bytes:  # x2 for double buffering
            return tq
    return Lq  # fall back to full-extent block (always legal)


def scaled_dot_product_attention(q, k, v, attn_mask=None, *, tq=None):
    """q: (B, Lq, Dk), k: (B, Lk, Dk), v: (B, Lk, Dv),
    attn_mask: optional (B, Lq, Lk) bool/int (truthy = mask out)."""
    B, Lq, Dk = q.shape
    Bk, Lk, Dk2 = k.shape
    Bv, Lk2, Dv = v.shape
    assert (Bk, Dk2) == (B, Dk)
    assert (Bv, Lk2) == (B, Lk)

    scale = 1.0 / math.sqrt(Dk)
    itemsize = jnp.dtype(q.dtype).itemsize
    TQ = _pick_tq(Lq, Lk, Dk, Dv, itemsize, requested=tq)
    grid = (B, Lq // TQ)

    q_spec = pl.BlockSpec((1, TQ, Dk), lambda b, i: (b, i, 0))
    # K/V index maps ignore the q-tile axis -> blocks stay resident in VMEM
    # across the inner grid axis (no re-DMA per q tile).
    k_spec = pl.BlockSpec((1, Lk, Dk), lambda b, i: (b, 0, 0))
    v_spec = pl.BlockSpec((1, Lk, Dv), lambda b, i: (b, 0, 0))

    out_specs = [
        pl.BlockSpec((1, TQ, Dv), lambda b, i: (b, i, 0)),
        pl.BlockSpec((1, TQ, Lk), lambda b, i: (b, i, 0)),
    ]
    out_shape = (
        jax.ShapeDtypeStruct((B, Lq, Dv), q.dtype),
        jax.ShapeDtypeStruct((B, Lq, Lk), q.dtype),  # attn in input dtype
    )

    compiler_params = pltpu.CompilerParams(
        dimension_semantics=("parallel", "parallel"),
    )

    if attn_mask is not None:
        assert attn_mask.shape == (B, Lq, Lk)
        mask = attn_mask.astype(jnp.int8)  # 1 byte/elem DMA instead of 4
        kernel = functools.partial(_sdpa_kernel_masked, scale=scale)
        in_specs = [
            q_spec,
            k_spec,
            v_spec,
            pl.BlockSpec((1, TQ, Lk), lambda b, i: (b, i, 0)),
        ]
        args = (q, k, v, mask)
    else:
        kernel = functools.partial(_sdpa_kernel_nomask, scale=scale)
        in_specs = [q_spec, k_spec, v_spec]
        args = (q, k, v)

    out, attn = pl.pallas_call(
        kernel,
        out_shape=out_shape,
        grid_spec=pltpu.PrefetchScalarGridSpec(
            num_scalar_prefetch=0,
            grid=grid,
            in_specs=in_specs,
            out_specs=out_specs,
        ),
        compiler_params=compiler_params,
    )(*args)
    return out, attn


def _reference(q, k, v, attn_mask, d_k):
    qf = q.astype(jnp.float32)
    kf = k.astype(jnp.float32)
    vf = v.astype(jnp.float32)
    scores = jnp.einsum("bqd,bkd->bqk", qf, kf) / math.sqrt(d_k)
    if attn_mask is not None:
        scores = jnp.where(attn_mask, -jnp.inf, scores)
    attn = jax.nn.softmax(scores, axis=-1)
    out = jnp.einsum("bqk,bkd->bqd", attn, vf)
    return out.astype(q.dtype), attn.astype(q.dtype)


if __name__ == "__main__":
    key = jax.random.PRNGKey(0)
    B, Lq, Lk, Dk, Dv = 2, 128, 128, 64, 64

    kq, kk, kv = jax.random.split(key, 3)
    q = jax.random.normal(kq, (B, Lq, Dk), dtype=jnp.float32)
    k = jax.random.normal(kk, (B, Lk, Dk), dtype=jnp.float32)
    v = jax.random.normal(kv, (B, Lk, Dv), dtype=jnp.float32)

    # Deterministic causal-style mask (no fully-masked rows -> no NaN rows).
    mask = jnp.triu(jnp.ones((Lq, Lk), dtype=bool), k=1)
    mask = jnp.broadcast_to(mask, (B, Lq, Lk))

    # Masked path, tq=64 so the grid actually tiles Lq: grid = (2, 2).
    out, attn = scaled_dot_product_attention(q, k, v, mask, tq=64)
    jax.block_until_ready((out, attn))
    ref_out, ref_attn = _reference(q, k, v, mask, Dk)
    assert jnp.allclose(out, ref_out, atol=1e-4, rtol=1e-4)
    assert jnp.allclose(attn, ref_attn, atol=1e-4, rtol=1e-4)

    # No-mask path (separate kernel, no dummy mask DMA), auto tile size.
    out2, attn2 = scaled_dot_product_attention(q, k, v, None)
    jax.block_until_ready((out2, attn2))
    ref_out2, ref_attn2 = _reference(q, k, v, None, Dk)
    assert jnp.allclose(out2, ref_out2, atol=1e-4, rtol=1e-4)
    assert jnp.allclose(attn2, ref_attn2, atol=1e-4, rtol=1e-4)

    # bf16 path: inputs feed the MXU natively in bf16 (loose tolerance check).
    qb, kb, vb = q.astype(jnp.bfloat16), k.astype(jnp.bfloat16), v.astype(jnp.bfloat16)
    out3, attn3 = scaled_dot_product_attention(qb, kb, vb, mask, tq=64)
    jax.block_until_ready((out3, attn3))
    ref_out3, ref_attn3 = _reference(qb, kb, vb, mask, Dk)
    assert jnp.allclose(out3.astype(jnp.float32), ref_out3.astype(jnp.float32),
                        atol=5e-2, rtol=5e-2)

    print("KERNEL_OK")
</pallas_src>

<mosaic_0001>
module attributes {stable_mosaic.version = 11 : i64} {
  func.func @_sdpa_kernel_masked(%arg0: i32, %arg1: i32, %arg2: memref<1x64x64xf32, #tpu.memory_space<vmem>>, %arg3: memref<1x128x64xf32, #tpu.memory_space<vmem>>, %arg4: memref<1x128x64xf32, #tpu.memory_space<vmem>>, %arg5: memref<1x64x128xi8, #tpu.memory_space<vmem>>, %arg6: memref<1x64x64xf32, #tpu.memory_space<vmem>>, %arg7: memref<1x64x128xf32, #tpu.memory_space<vmem>>) attributes {dimension_semantics = [#tpu.dimension_semantics<parallel>, #tpu.dimension_semantics<parallel>], iteration_bounds = array<i64: 2, 2>, scalar_prefetch = 0 : i64, scratch_operands = 0 : i64, tpu.core_type = #tpu.core_type<tc>, window_params = [{transform_indices = @transform_0, window_bounds = array<i64: 1, 64, 64>}, {transform_indices = @transform_1, window_bounds = array<i64: 1, 128, 64>}, {transform_indices = @transform_2, window_bounds = array<i64: 1, 128, 64>}, {transform_indices = @transform_3, window_bounds = array<i64: 1, 64, 128>}, {transform_indices = @transform_4, window_bounds = array<i64: 1, 64, 64>}, {transform_indices = @transform_5, window_bounds = array<i64: 1, 64, 128>}]} {
    %c0 = arith.constant 0 : index
    %c0_0 = arith.constant 0 : index
    %c0_1 = arith.constant 0 : index
    %0 = vector.load %arg2[%c0, %c0_0, %c0_1] : memref<1x64x64xf32, #tpu.memory_space<vmem>>, vector<1x64x64xf32>
    %1 = vector.shape_cast %0 : vector<1x64x64xf32> to vector<64x64xf32>
    %c0_2 = arith.constant 0 : index
    %c0_3 = arith.constant 0 : index
    %c0_4 = arith.constant 0 : index
    %2 = vector.load %arg3[%c0_2, %c0_3, %c0_4] : memref<1x128x64xf32, #tpu.memory_space<vmem>>, vector<1x128x64xf32>
    %3 = vector.shape_cast %2 : vector<1x128x64xf32> to vector<128x64xf32>
    %c0_5 = arith.constant 0 : index
    %c0_6 = arith.constant 0 : index
    %c0_7 = arith.constant 0 : index
    %4 = vector.load %arg4[%c0_5, %c0_6, %c0_7] : memref<1x128x64xf32, #tpu.memory_space<vmem>>, vector<1x128x64xf32>
    %5 = vector.shape_cast %4 : vector<1x128x64xf32> to vector<128x64xf32>
    %cst = arith.constant 1.250000e-01 : f32
    %6 = vector.broadcast %cst : f32 to vector<64x64xf32>
    %7 = arith.mulf %1, %6 : vector<64x64xf32>
    %cst_8 = arith.constant dense<0.000000e+00> : vector<64x128xf32>
    %8 = tpu.matmul %7, %3, %cst_8 {dimension_numbers = #tpu.dot_dimension_numbers<[1], [1], [0], [0], [0, 0, 1, 0], [], []>} : vector<64x64xf32>, vector<128x64xf32>, vector<64x128xf32> -> vector<64x128xf32>
    %c0_9 = arith.constant 0 : index
    %c0_10 = arith.constant 0 : index
    %c0_11 = arith.constant 0 : index
    %9 = vector.load %arg5[%c0_9, %c0_10, %c0_11] : memref<1x64x128xi8, #tpu.memory_space<vmem>>, vector<1x64x128xi8>
    %10 = vector.shape_cast %9 : vector<1x64x128xi8> to vector<64x128xi8>
    %c0_i8 = arith.constant 0 : i8
    %11 = vector.broadcast %c0_i8 : i8 to vector<64x128xi8>
    %12 = arith.cmpi ne, %10, %11 : vector<64x128xi8>
    %cst_12 = arith.constant 0xFF800000 : f32
    %13 = vector.broadcast %cst_12 : f32 to vector<64x128xf32>
    %14 = arith.select %12, %13, %8 : vector<64x128xi1>, vector<64x128xf32>
    %cst_13 = arith.constant dense<0xFF800000> : vector<64xf32>
    %15 = vector.multi_reduction <maximumf>, %14, %cst_13 [1] : vector<64x128xf32> to vector<64xf32>
    %16 = vector.shape_cast %15 : vector<64xf32> to vector<64x1xf32>
    %17 = vector.broadcast %16 : vector<64x1xf32> to vector<64x128xf32>
    %18 = arith.subf %14, %17 : vector<64x128xf32>
    %19 = math.exp %18 : vector<64x128xf32>
    %cst_14 = arith.constant dense<0.000000e+00> : vector<64xf32>
    %20 = vector.multi_reduction <add>, %19, %cst_14 [1] : vector<64x128xf32> to vector<64xf32>
    %21 = vector.shape_cast %20 : vector<64xf32> to vector<64x1xf32>
    %22 = tpu.reciprocal %21 {approx = true} : vector<64x1xf32> -> vector<64x1xf32>
    %23 = arith.mulf %21, %22 : vector<64x1xf32>
    %cst_15 = arith.constant 2.000000e+00 : f32
    %24 = vector.broadcast %cst_15 : f32 to vector<64x1xf32>
    %25 = arith.subf %24, %23 : vector<64x1xf32>
    %26 = arith.mulf %22, %25 : vector<64x1xf32>
    %27 = vector.broadcast %26 : vector<64x1xf32> to vector<64x128xf32>
    %28 = arith.mulf %19, %27 : vector<64x128xf32>
    %cst_16 = arith.constant dense<0.000000e+00> : vector<64x64xf32>
    %29 = tpu.matmul %28, %5, %cst_16 {dimension_numbers = #tpu.dot_dimension_numbers<[1], [0], [0], [1], [0, 0, 1, 1], [], []>} : vector<64x128xf32>, vector<128x64xf32>, vector<64x64xf32> -> vector<64x64xf32>
    %c0_17 = arith.constant 0 : index
    %c0_18 = arith.constant 0 : index
    %c0_19 = arith.constant 0 : index
    %30 = vector.load %arg6[%c0_17, %c0_18, %c0_19] : memref<1x64x64xf32, #tpu.memory_space<vmem>>, vector<1x64x64xf32>
    %31 = vector.shape_cast %30 : vector<1x64x64xf32> to vector<64x64xf32>
    %32 = vector.shape_cast %29 : vector<64x64xf32> to vector<1x64x64xf32>
    tpu.vector_store %arg6[%c0_17, %c0_18, %c0_19], %32 {strides = array<i32>} : memref<1x64x64xf32, #tpu.memory_space<vmem>>, vector<1x64x64xf32>,
    %c0_20 = arith.constant 0 : index
    %c0_21 = arith.constant 0 : index
    %c0_22 = arith.constant 0 : index
    %33 = vector.load %arg7[%c0_20, %c0_21, %c0_22] : memref<1x64x128xf32, #tpu.memory_space<vmem>>, vector<1x64x128xf32>
    %34 = vector.shape_cast %33 : vector<1x64x128xf32> to vector<64x128xf32>
    %35 = vector.shape_cast %28 : vector<64x128xf32> to vector<1x64x128xf32>
    tpu.vector_store %arg7[%c0_20, %c0_21, %c0_22], %35 {strides = array<i32>} : memref<1x64x128xf32, #tpu.memory_space<vmem>>, vector<1x64x128xf32>,
    return
  }
  func.func @transform_0(%arg0: i32, %arg1: i32) -> (i32, i32, i32) {
    %c0_i32 = arith.constant 0 : i32
    %c0_i32_0 = arith.constant 0 : i32
    return %arg0, %arg1, %c0_i32 : i32, i32, i32
  }
  func.func @transform_1(%arg0: i32, %arg1: i32) -> (i32, i32, i32) {
    %c0_i32 = arith.constant 0 : i32
    %c0_i32_0 = arith.constant 0 : i32
    %c0_i32_1 = arith.constant 0 : i32
    return %arg0, %c0_i32, %c0_i32_0 : i32, i32, i32
  }
  func.func @transform_2(%arg0: i32, %arg1: i32) -> (i32, i32, i32) {
    %c0_i32 = arith.constant 0 : i32
    %c0_i32_0 = arith.constant 0 : i32
    %c0_i32_1 = arith.constant 0 : i32
    return %arg0, %c0_i32, %c0_i32_0 : i32, i32, i32
  }
  func.func @transform_3(%arg0: i32, %arg1: i32) -> (i32, i32, i32) {
    %c0_i32 = arith.constant 0 : i32
    %c0_i32_0 = arith.constant 0 : i32
    return %arg0, %arg1, %c0_i32 : i32, i32, i32
  }
  func.func @transform_4(%arg0: i32, %arg1: i32) -> (i32, i32, i32) {
    %c0_i32 = arith.constant 0 : i32
    %c0_i32_0 = arith.constant 0 : i32
    return %arg0, %arg1, %c0_i32 : i32, i32, i32
  }
  func.func @transform_5(%arg0: i32, %arg1: i32) -> (i32, i32, i32) {
    %c0_i32 = arith.constant 0 : i32
    %c0_i32_0 = arith.constant 0 : i32
    return %arg0, %arg1, %c0_i32 : i32, i32, i32
  }
}

</mosaic_0001>

<llo_original>
// kernel: tpu_custom_call.1
$region0: #{tpu_custom_call.1}
  #allocation0 [shape = 'u32[]', space=smem, size = 0x4, offset = 0x4, fixed_abs, tag = 'smem constant byte address 0x4 - core index']
  #allocation1 [shape = 'u32[72,128]{1,0:T(1,128)}', space=vmem, size = 0x9000, scoped, tag = 'internal scratch']
  %s0 = inlined_call_operand.vmem [shape: f32[2,128,64], index: 0, kind: input, shape index: {}]
  %s1 = inlined_call_operand.vmem [shape: f32[2,128,64], index: 1, kind: input, shape index: {}]
  %s2 = inlined_call_operand.vmem [shape: f32[2,128,64], index: 2, kind: input, shape index: {}]
  %s3 = inlined_call_operand.vmem [shape: s8[2,128,128], index: 3, kind: input, shape index: {}]
  %s4 = inlined_call_operand.vmem [shape: f32[2,128,64], index: 4, kind: output, shape index: {0}]
  %s5 = inlined_call_operand.hbm [shape: f32[2,128,128], index: 5, kind: output, shape index: {1}]
  %6 = xla_tuple %s4, %s5
  %s7 = sld [smem:[#allocation0]]
  $region57: #{tpu_custom_call.1} parent=0
    _
  %s9 = ssub.s32 1, %s7
  %s10 = scalar_select 0, %s9, %s7
  $region1: #{tpu_custom_call.1} parent=0
    #allocation2 [shape = 'u8[65536]{0}', space=vmem, size = 0x10000, scoped, tag = 'output window, operand 1']
    #allocation3 [shape = 's32[2]{0}', space=sflag, size = 0x8, scoped, tag = 'scoped memory for tpu_custom_call.1']
    %11 = vsyncpa [#allocation3], 0
    %s12 = scalar_lea.sflag [#allocation3], 1
    %13 = vsyncpa %s12, 0
    loop: start=0, step=1, limit=6
    $region2: #{tpu_custom_call.1} parent=1 // loop_pre_header
      _
    $region3: #{tpu_custom_call.1} parent=1 // loop_header
      %s15 = sphi 0, %s19
      %p16 = scmp.ge.s32.totalorder %s15, 6
      %s22 = sphi 0, %s34
      %s23 = sphi 0, %s30
      %s24 = sphi 0, %s22
      %s25 = sphi 0, %s23
      %s26 = sphi 0, %s24
      %s27 = sphi 0, %s25
      %s39 = sphi 0, %s41
      %s42 = sphi 0, %s39
      %s43 = sphi 0, %s42
      %s59 = sphi 0, %s43
      %s65 = sphi 0, %s67
      %s68 = sphi 0, %s65
      %s69 = sphi 0, %s68
      %s85 = sphi 0, %s69
      %s91 = sphi 0, %s93
      %s94 = sphi 0, %s91
      %s95 = sphi 0, %s94
      %s111 = sphi 0, %s95
      %s119 = sphi 0, %s121
      %s122 = sphi 0, %s119
      %s123 = sphi 0, %s122
      %s139 = sphi 0, %s123
      %s147 = sphi 0, %s149
      %s150 = sphi 0, %s147
      %s151 = sphi 0, %s150
      %s167 = sphi 0, %s151
      %s175 = sphi 0, %s177
      %s178 = sphi 0, %s175
      %s179 = sphi 0, %s178
      %s195 = sphi 0, %s179
    $region4: #{tpu_custom_call.1} parent=1 // loop_header_branch
      %18 = sbr.rel (%p16) target = $region8
    $region5: #{tpu_custom_call.1} parent=1 // loop_body
      %s20 = ssub.s32 %s15, 1
      %s21 = ssub.s32 %s15, 2
      %s28 = sadd.s32 1, %s23
      %p29 = scmp.ge.s32.totalorder %s28, 2
      %s30 = scalar_select %p29, 0, %s28
      %s31 = sadd.s32 1, %s22
      %s32 = scalar_select %p29, %s31, %s22
      %p33 = scmp.ge.s32.totalorder %s32, 2
      %s34 = scalar_select %p33, 0, %s32
      %s35 = ssub.s32 %s22, %s34
      %s36 = ssub.s32 %s23, %s30
      %s37 = sor.u32 %s35, %s36
      %p38 = scmp.eq.s32.totalorder %s37, 0
      %s40 = sadd.s32 %s39, 1
      %s41 = scalar_select %p38, %s39, %s40
      %p44 = pneg %p38
      %p45 = scmp.eq.s32.totalorder %s15, 3
      %p46 = por %p44, %p45
      %p47 = scmp.ne.s32.totalorder %s39, %s42
      %p48 = scmp.eq.s32.totalorder %s15, 0
      %p49 = por %p47, %p48
      %p50 = scmp.ne.s32.totalorder %s39, %s42
      %p51 = scmp.eq.s32.totalorder %s20, 3
      %p52 = por %p50, %p51
      %p53 = scmp.ne.s32.totalorder %s42, %s43
      %p54 = scmp.eq.s32.totalorder %s20, 0
      %p55 = por %p53, %p54
      %p56 = scmp.ne.s32.totalorder %s42, %s43
      %p57 = scmp.eq.s32.totalorder %s21, 3
      %p58 = por %p56, %p57
      %p60 = scmp.ne.s32.totalorder %s43, %s59
      %p61 = scmp.eq.s32.totalorder %s21, 0
      %p62 = por %p60, %p61
      %s63 = ssub.s32 %s22, %s34
      %p64 = scmp.eq.s32.totalorder %s63, 0
      %s66 = sadd.s32 %s65, 1
      %s67 = scalar_select %p64, %s65, %s66
      %p70 = pneg %p64
      %p71 = scmp.eq.s32.totalorder %s15, 3
      %p72 = por %p70, %p71
      %p73 = scmp.ne.s32.totalorder %s65, %s68
      %p74 = scmp.eq.s32.totalorder %s15, 0
      %p75 = por %p73, %p74
      %p76 = scmp.ne.s32.totalorder %s65, %s68
      %p77 = scmp.eq.s32.totalorder %s20, 3
      %p78 = por %p76, %p77
      %p79 = scmp.ne.s32.totalorder %s68, %s69
      %p80 = scmp.eq.s32.totalorder %s20, 0
      %p81 = por %p79, %p80
      %p82 = scmp.ne.s32.totalorder %s68, %s69
      %p83 = scmp.eq.s32.totalorder %s21, 3
      %p84 = por %p82, %p83
      %p86 = scmp.ne.s32.totalorder %s69, %s85
      %p87 = scmp.eq.s32.totalorder %s21, 0
      %p88 = por %p86, %p87
      %s89 = ssub.s32 %s22, %s34
      %p90 = scmp.eq.s32.totalorder %s89, 0
      %s92 = sadd.s32 %s91, 1
      %s93 = scalar_select %p90, %s91, %s92
      %p96 = pneg %p90
      %p97 = scmp.eq.s32.totalorder %s15, 3
      %p98 = por %p96, %p97
      %p99 = scmp.ne.s32.totalorder %s91, %s94
      %p100 = scmp.eq.s32.totalorder %s15, 0
      %p101 = por %p99, %p100
      %p102 = scmp.ne.s32.totalorder %s91, %s94
      %p103 = scmp.eq.s32.totalorder %s20, 3
      %p104 = por %p102, %p103
      %p105 = scmp.ne.s32.totalorder %s94, %s95
      %p106 = scmp.eq.s32.totalorder %s20, 0
      %p107 = por %p105, %p106
      %p108 = scmp.ne.s32.totalorder %s94, %s95
      %p109 = scmp.eq.s32.totalorder %s21, 3
      %p110 = por %p108, %p109
      %p112 = scmp.ne.s32.totalorder %s95, %s111
      %p113 = scmp.eq.s32.totalorder %s21, 0
      %p114 = por %p112, %p113
      %s115 = ssub.s32 %s22, %s34
      %s116 = ssub.s32 %s23, %s30
      %s117 = sor.u32 %s115, %s116
      %p118 = scmp.eq.s32.totalorder %s117, 0
      %s120 = sadd.s32 %s119, 1
      %s121 = scalar_select %p118, %s119, %s120
      %p124 = pneg %p118
      %p125 = scmp.eq.s32.totalorder %s15, 3
      %p126 = por %p124, %p125
      %p127 = scmp.ne.s32.totalorder %s119, %s122
      %p128 = scmp.eq.s32.totalorder %s15, 0
      %p129 = por %p127, %p128
      %p130 = scmp.ne.s32.totalorder %s119, %s122
      %p131 = scmp.eq.s32.totalorder %s20, 3
      %p132 = por %p130, %p131
      %p133 = scmp.ne.s32.totalorder %s122, %s123
      %p134 = scmp.eq.s32.totalorder %s20, 0
      %p135 = por %p133, %p134
      %p136 = scmp.ne.s32.totalorder %s122, %s123
      %p137 = scmp.eq.s32.totalorder %s21, 3
      %p138 = por %p136, %p137
      %p140 = scmp.ne.s32.totalorder %s123, %s139
      %p141 = scmp.eq.s32.totalorder %s21, 0
      %p142 = por %p140, %p141
      %s143 = ssub.s32 %s22, %s34
      %s144 = ssub.s32 %s23, %s30
      %s145 = sor.u32 %s143, %s144
      %p146 = scmp.eq.s32.totalorder %s145, 0
      %s148 = sadd.s32 %s147, 1
      %s149 = scalar_select %p146, %s147, %s148
      %p152 = pneg %p146
      %p153 = scmp.eq.s32.totalorder %s15, 3
      %p154 = por %p152, %p153
      %p155 = scmp.ne.s32.totalorder %s147, %s150
      %p156 = scmp.eq.s32.totalorder %s15, 0
      %p157 = por %p155, %p156
      %p158 = scmp.ne.s32.totalorder %s147, %s150
      %p159 = scmp.eq.s32.totalorder %s20, 3
      %p160 = por %p158, %p159
      %p161 = scmp.ne.s32.totalorder %s150, %s151
      %p162 = scmp.eq.s32.totalorder %s20, 0
      %p163 = por %p161, %p162
      %p164 = scmp.ne.s32.totalorder %s150, %s151
      %p165 = scmp.eq.s32.totalorder %s21, 3
      %p166 = por %p164, %p165
      %p168 = scmp.ne.s32.totalorder %s151, %s167
      %p169 = scmp.eq.s32.totalorder %s21, 0
      %p170 = por %p168, %p169
      %s171 = ssub.s32 %s22, %s34
      %s172 = ssub.s32 %s23, %s30
      %s173 = sor.u32 %s171, %s172
      %p174 = scmp.eq.s32.totalorder %s173, 0
      %s176 = sadd.s32 %s175, 1
      %s177 = scalar_select %p174, %s175, %s176
      %p180 = pneg %p174
      %p181 = scmp.eq.s32.totalorder %s15, 3
      %p182 = por %p180, %p181
      %p183 = scmp.ne.s32.totalorder %s175, %s178
      %p184 = scmp.eq.s32.totalorder %s15, 0
      %p185 = por %p183, %p184
      %p186 = scmp.ne.s32.totalorder %s175, %s178
      %p187 = scmp.eq.s32.totalorder %s20, 3
      %p188 = por %p186, %p187
      %p189 = scmp.ne.s32.totalorder %s178, %s179
      %p190 = scmp.eq.s32.totalorder %s20, 0
      %p191 = por %p189, %p190
      %p192 = scmp.ne.s32.totalorder %s178, %s179
      %p193 = scmp.eq.s32.totalorder %s21, 3
      %p194 = por %p192, %p193
      %p196 = scmp.ne.s32.totalorder %s179, %s195
      %p197 = scmp.eq.s32.totalorder %s21, 0
      %p198 = por %p196, %p197
      %p199 = scmp.le.s32.totalorder 1, %s15
      %p200 = scmp.lt.s32.totalorder %s15, 5
      %p201 = pnand %p199, %p200
      %p202 = pneg %p201
      // Predicated region
      $region9: #{tpu_custom_call.1} parent=5 // pred_check
        _
      $region10: #{tpu_custom_call.1} parent=5 // pred_check_branch
        %204 = sbr.rel (%p201) target = $region12
      $region11: #{tpu_custom_call.1} parent=5 // pred_region
        %s205 = ssub.s32 %s15, 1
      $region12: #{tpu_custom_call.1} parent=5 // pred_fallthru
        _
      %p206 = scmp.lt.s32.totalorder %s15, 4
      // Predicated region
      $region13: #{tpu_custom_call.1} parent=5 // pred_check
        %p207 = pneg %p206
      $region14: #{tpu_custom_call.1} parent=5 // pred_check_branch
        %209 = sbr.rel (%p207) target = $region16
      $region15: #{tpu_custom_call.1} parent=5 // pred_region
        // Predicated region
        $region17: #{tpu_custom_call.1} parent=15 // pred_check
          %p210 = pneg %p49
        $region18: #{tpu_custom_call.1} parent=15 // pred_check_branch
          %212 = sbr.rel (%p210) target = $region20
        $region19: #{tpu_custom_call.1} parent=15 // pred_region
          %s213 = smul.u32 8, %s23
          %p214 = scmp.lt.s32.totalorder %s22, 1
          %s215 = scalar_select %p214, %s22, 1
          %p216 = scmp.lt.s32.totalorder %s213, 15
          %s217 = scalar_select %p216, %s213, 15
          %s218 = smul.addr %s215, 16
          %s219 = sadd.s32 %s217, %s218
          %s220 = smul.addr %s219, 8
          %s221 = scalar_lea.vmem %s0, %s220
          %s222 = smul.u32 8, %s23
        $region20: #{tpu_custom_call.1} parent=15 // pred_fallthru
          _
        // Predicated region
        $region21: #{tpu_custom_call.1} parent=15 // pred_check
          %p223 = pneg %p75
        $region22: #{tpu_custom_call.1} parent=15 // pred_check_branch
          %225 = sbr.rel (%p223) target = $region24
        $region23: #{tpu_custom_call.1} parent=15 // pred_region
          %p226 = scmp.lt.s32.totalorder %s22, 1
          %s227 = scalar_select %p226, %s22, 1
          %s228 = smul.addr %s227, 16
          %s229 = smul.addr %s228, 8
          %s230 = scalar_lea.vmem %s1, %s229
        $region24: #{tpu_custom_call.1} parent=15 // pred_fallthru
          _
        // Predicated region
        $region25: #{tpu_custom_call.1} parent=15 // pred_check
          %p231 = pneg %p101
        $region26: #{tpu_custom_call.1} parent=15 // pred_check_branch
          %233 = sbr.rel (%p231) target = $region28
        $region27: #{tpu_custom_call.1} parent=15 // pred_region
          %p234 = scmp.lt.s32.totalorder %s22, 1
          %s235 = scalar_select %p234, %s22, 1
          %s236 = smul.addr %s235, 16
          %s237 = smul.addr %s236, 8
          %s238 = scalar_lea.vmem %s2, %s237
        $region28: #{tpu_custom_call.1} parent=15 // pred_fallthru
          _
        // Predicated region
        $region29: #{tpu_custom_call.1} parent=15 // pred_check
          %p239 = pneg %p129
        $region30: #{tpu_custom_call.1} parent=15 // pred_check_branch
          %241 = sbr.rel (%p239) target = $region32
        $region31: #{tpu_custom_call.1} parent=15 // pred_region
          %s242 = smul.u32 2, %s23
          %p243 = scmp.lt.s32.totalorder %s22, 1
          %s244 = scalar_select %p243, %s22, 1
          %p245 = scmp.lt.s32.totalorder %s242, 3
          %s246 = scalar_select %p245, %s242, 3
          %s247 = smul.addr %s244, 4
          %s248 = sadd.s32 %s246, %s247
          %s249 = smul.addr %s248, 8
          %s250 = scalar_lea.vmem %s3, %s249
          %s251 = smul.u32 2, %s23
        $region32: #{tpu_custom_call.1} parent=15 // pred_fallthru
          _
      $region16: #{tpu_custom_call.1} parent=5 // pred_fallthru
        _
      %p252 = scmp.le.s32.totalorder 1, %s15
      %p253 = scmp.lt.s32.totalorder %s15, 5
      %p254 = pnand %p252, %p253
      %p255 = pneg %p254
      // Predicated region
      $region33: #{tpu_custom_call.1} parent=5 // pred_check
        _
      $region34: #{tpu_custom_call.1} parent=5 // pred_check_branch
        %257 = sbr.rel (%p254) target = $region36
      $region35: #{tpu_custom_call.1} parent=5 // pred_region
        %s258 = ssub.s32 %s15, 1
        %s259 = smul.u32 8, %s25
        %p260 = scmp.lt.s32.totalorder %s24, 1
        %s261 = scalar_select %p260, %s24, 1
        %p262 = scmp.lt.s32.totalorder %s259, 15
        %s263 = scalar_select %p262, %s259, 15
        %s264 = smul.addr %s261, 16
        %s265 = sadd.s32 %s263, %s264
        %s266 = smul.addr %s265, 8
        %s267 = scalar_lea.vmem %s0, %s266
        %p268 = pneg %p55
        %p269 = pneg %p52
        %p270 = scmp.lt.s32.totalorder %s24, 1
        %s271 = scalar_select %p270, %s24, 1
        %s272 = smul.addr %s271, 16
        %s273 = smul.addr %s272, 8
        %s274 = scalar_lea.vmem %s1, %s273
        %p275 = pneg %p81
        %p276 = pneg %p78
        %p277 = scmp.lt.s32.totalorder %s24, 1
        %s278 = scalar_select %p277, %s24, 1
        %s279 = smul.addr %s278, 16
        %s280 = smul.addr %s279, 8
        %s281 = scalar_lea.vmem %s2, %s280
        %p282 = pneg %p107
        %p283 = pneg %p104
        %s284 = smul.u32 2, %s25
        %p285 = scmp.lt.s32.totalorder %s24, 1
        %s286 = scalar_select %p285, %s24, 1
        %p287 = scmp.lt.s32.totalorder %s284, 3
        %s288 = scalar_select %p287, %s284, 3
        %s289 = smul.addr %s286, 4
        %s290 = sadd.s32 %s288, %s289
        %s291 = smul.addr %s290, 8
        %s292 = scalar_lea.vmem %s3, %s291
        %p293 = pneg %p135
        %p294 = pneg %p132
        %p295 = pneg %p163
        %p296 = pneg %p160
        %s297 = smul.u32 8, %s25
        %p298 = scmp.lt.s32.totalorder %s24, 1
        %s299 = scalar_select %p298, %s24, 1
        %p300 = scmp.lt.s32.totalorder %s297, 15
        %s301 = scalar_select %p300, %s297, 15
        %s302 = smul.addr %s299, 16
        %s303 = sadd.s32 %s301, %s302
        %s304 = smul.addr %s303, 8
        %s305 = scalar_lea.vmem %s4, %s304
        %p306 = pneg %p191
        %p307 = pneg %p188
        %s308 = sand.u32 %s178, 1
        %s309 = scalar_lea.sflag [#allocation3], %s308
        %s310 = sand.u32 %s178, 1
        %s311 = smul.addr %s310, 64
        %s312 = scalar_lea.vmem [#allocation2], %s311
        %s313 = smul.u32 8, %s25
        %p314 = scmp.lt.s32.totalorder %s24, 1
        %s315 = scalar_select %p314, %s24, 1
        %p316 = scmp.lt.s32.totalorder %s313, 15
        %s317 = scalar_select %p316, %s313, 15
        %s318 = smul.addr %s315, 16
        %s319 = sadd.s32 %s317, %s318
        %s320 = smul.addr %s319, 8
        %s321 = scalar_lea.vmem %s0, %s320
        %s322 = smul.u32 8, %s25
        %p323 = scmp.lt.s32.totalorder %s24, 1
        %s324 = scalar_select %p323, %s24, 1
        %s325 = smul.addr %s324, 16
        %s326 = smul.addr %s325, 8
        %s327 = scalar_lea.vmem %s1, %s326
        %p328 = scmp.lt.s32.totalorder %s24, 1
        %s329 = scalar_select %p328, %s24, 1
        %s330 = smul.addr %s329, 16
        %s331 = smul.addr %s330, 8
        %s332 = scalar_lea.vmem %s2, %s331
        %s333 = smul.u32 2, %s25
        %p334 = scmp.lt.s32.totalorder %s24, 1
        %s335 = scalar_select %p334, %s24, 1
        %p336 = scmp.lt.s32.totalorder %s333, 3
        %s337 = scalar_select %p336, %s333, 3
        %s338 = smul.addr %s335, 4
        %s339 = sadd.s32 %s337, %s338
        %s340 = smul.addr %s339, 8
        %s341 = scalar_lea.vmem %s3, %s340
        %s342 = smul.u32 2, %s25
        %s343 = smul.u32 8, %s25
        %p344 = scmp.lt.s32.totalorder %s24, 1
        %s345 = scalar_select %p344, %s24, 1
        %p346 = scmp.lt.s32.totalorder %s343, 15
        %s347 = scalar_select %p346, %s343, 15
        %s348 = smul.addr %s345, 16
        %s349 = sadd.s32 %s347, %s348
        %s350 = smul.addr %s349, 8
        %s351 = scalar_lea.vmem %s4, %s350
        %s352 = smul.u32 8, %s25
        %s353 = smul.u32 8, %s25
        %v356 = vld [vmem:[%s321] sm:$0xff]
        %v357 = vld [vmem:[%s321 + $0x8] sm:$0xff]
        %v358 = vld [vmem:[%s321 + $0x10] sm:$0xff]
        %v359 = vld [vmem:[%s321 + $0x18] sm:$0xff]
        %v360 = vld [vmem:[%s321 + $0x20] sm:$0xff]
        %v361 = vld [vmem:[%s321 + $0x28] sm:$0xff]
        %v362 = vld [vmem:[%s321 + $0x30] sm:$0xff]
        %v363 = vld [vmem:[%s321 + $0x38] sm:$0xff]
        %v364 = vld [vmem:[%s327] sm:$0xff]
        %v365 = vld [vmem:[%s327 + $0x8] sm:$0xff]
        %v366 = vld [vmem:[%s327 + $0x10] sm:$0xff]
        %v367 = vld [vmem:[%s327 + $0x18] sm:$0xff]
        %v368 = vld [vmem:[%s327 + $0x20] sm:$0xff]
        %v369 = vld [vmem:[%s327 + $0x28] sm:$0xff]
        %v370 = vld [vmem:[%s327 + $0x30] sm:$0xff]
        %v371 = vld [vmem:[%s327 + $0x38] sm:$0xff]
        %v372 = vld [vmem:[%s327 + $0x40] sm:$0xff]
        %v373 = vld [vmem:[%s327 + $0x48] sm:$0xff]
        %v374 = vld [vmem:[%s327 + $0x50] sm:$0xff]
        %v375 = vld [vmem:[%s327 + $0x58] sm:$0xff]
        %v376 = vld [vmem:[%s327 + $0x60] sm:$0xff]
        %v377 = vld [vmem:[%s327 + $0x68] sm:$0xff]
        %v378 = vld [vmem:[%s327 + $0x70] sm:$0xff]
        %v379 = vld [vmem:[%s327 + $0x78] sm:$0xff]
        %v380 = vld [vmem:[%s332] sm:$0xff]
        %v381 = vld [vmem:[%s332 + $0x8] sm:$0xff]
        %v382 = vld [vmem:[%s332 + $0x10] sm:$0xff]
        %v383 = vld [vmem:[%s332 + $0x18] sm:$0xff]
        %v384 = vld [vmem:[%s332 + $0x20] sm:$0xff]
        %v385 = vld [vmem:[%s332 + $0x28] sm:$0xff]
        %v386 = vld [vmem:[%s332 + $0x30] sm:$0xff]
        %v387 = vld [vmem:[%s332 + $0x38] sm:$0xff]
        %v388 = vld [vmem:[%s332 + $0x40] sm:$0xff]
        %v389 = vld [vmem:[%s332 + $0x48] sm:$0xff]
        %v390 = vld [vmem:[%s332 + $0x50] sm:$0xff]
        %v391 = vld [vmem:[%s332 + $0x58] sm:$0xff]
        %v392 = vld [vmem:[%s332 + $0x60] sm:$0xff]
        %v393 = vld [vmem:[%s332 + $0x68] sm:$0xff]
        %v394 = vld [vmem:[%s332 + $0x70] sm:$0xff]
        %v395 = vld [vmem:[%s332 + $0x78] sm:$0xff]
        %v396 = vmul.f32 %v356, 0.125
        %v397 = vmul.f32 %v357, 0.125
        %v398 = vmul.f32 %v358, 0.125
        %v399 = vmul.f32 %v359, 0.125
        %v400 = vmul.f32 %v360, 0.125
        %v401 = vmul.f32 %v361, 0.125
        %v402 = vmul.f32 %v362, 0.125
        %v403 = vmul.f32 %v363, 0.125
        %vm404 = vcmask 523264
        %v406 = vsel %vm404, %v396, 0
        %v409 = vsel %vm404, %v397, 0
        %v412 = vsel %vm404, %v398, 0
        %v415 = vsel %vm404, %v399, 0
        %v418 = vsel %vm404, %v400, 0
        %v421 = vsel %vm404, %v401, 0
        %v424 = vsel %vm404, %v402, 0
        %v427 = vsel %vm404, %v403, 0
        %v430 = vsel %vm404, %v364, 0
        %v433 = vsel %vm404, %v365, 0
        %v436 = vsel %vm404, %v366, 0
        %v439 = vsel %vm404, %v367, 0
        %v442 = vsel %vm404, %v368, 0
        %v445 = vsel %vm404, %v369, 0
        %v448 = vsel %vm404, %v370, 0
        %v451 = vsel %vm404, %v371, 0
        %v454 = vsel %vm404, %v372, 0
        %v457 = vsel %vm404, %v373, 0
        %v460 = vsel %vm404, %v374, 0
        %v463 = vsel %vm404, %v375, 0
        %v466 = vsel %vm404, %v376, 0
        %v469 = vsel %vm404, %v377, 0
        %v472 = vsel %vm404, %v378, 0
        %v475 = vsel %vm404, %v379, 0
        %477 = vmatpush.xpose.msra.mxu0 %v475
        %478 = vmatpush.xpose.msra.mxu0 %v472
        %479 = vmatpush.xpose.msra.mxu0 %v469
        %480 = vmatpush.xpose.msra.mxu0 %v466
        %481 = vmatpush.xpose.msra.mxu0 %v463
        %482 = vmatpush.xpose.msra.mxu0 %v460
        %483 = vmatpush.xpose.msra.mxu0 %v457
        %484 = vmatpush.xpose.msra.mxu0 %v454
        %485 = vmatpush.xpose.msra.mxu0 %v451
        %486 = vmatpush.xpose.msra.mxu0 %v448
        %487 = vmatpush.xpose.msra.mxu0 %v445
        %488 = vmatpush.xpose.msra.mxu0 %v442
        %489 = vmatpush.xpose.msra.mxu0 %v439
        %490 = vmatpush.xpose.msra.mxu0 %v436
        %491 = vmatpush.xpose.msra.mxu0 %v433
        %492 = vmatpush.xpose.msra.mxu0 %v430
        %493 = vmatmul.f32.gmra.mxu0 %v406
        %v494 = vpop.f32.mrf.mxu0
        %v495 = vadd.f32 0.0, %v494
        %496 = vmatmul.f32.gmra.mxu0 %v409
        %v497 = vpop.f32.mrf.mxu0
        %v498 = vadd.f32 0.0, %v497
        %499 = vmatmul.f32.gmra.mxu0 %v412
        %v500 = vpop.f32.mrf.mxu0
        %v501 = vadd.f32 0.0, %v500
        %502 = vmatmul.f32.gmra.mxu0 %v415
        %v503 = vpop.f32.mrf.mxu0
        %v504 = vadd.f32 0.0, %v503
        %505 = vmatmul.f32.gmra.mxu0 %v418
        %v506 = vpop.f32.mrf.mxu0
        %v507 = vadd.f32 0.0, %v506
        %508 = vmatmul.f32.gmra.mxu0 %v421
        %v509 = vpop.f32.mrf.mxu0
        %v510 = vadd.f32 0.0, %v509
        %511 = vmatmul.f32.gmra.mxu0 %v424
        %v512 = vpop.f32.mrf.mxu0
        %v513 = vadd.f32 0.0, %v512
        %514 = vmatmul.f32.gmra.mxu0 %v427
        %v515 = vpop.f32.mrf.mxu0
        %v516 = vadd.f32 0.0, %v515
        %517 = vdwg.mxu0
        %v518 = vld [vmem:[%s341] sm:$0xff]
        %v519 = vld [vmem:[%s341 + $0x8] sm:$0xff]
        %vm520 = vnez %v518
        %vm521 = vnez %v519
        %v522 = vsel %vm520, 16843009, 0
        %v523 = vsel %vm521, 16843009, 0
        %v524 = vunpack.c.0.s8 %v522
        %v525 = vunpack.c.1.s8 %v522
        %v526 = vunpack.c.2.s8 %v522
        %v527 = vunpack.c.3.s8 %v522
        %v528 = vunpack.c.0.s8 %v523
        %v529 = vunpack.c.1.s8 %v523
        %v530 = vunpack.c.2.s8 %v523
        %v531 = vunpack.c.3.s8 %v523
        %v532 = vpack.c.b16 %v524, %v524
        %v533 = vpack.c.b8 %v532, %v532
        %v534 = vpack.c.b16 %v525, %v525
        %v535 = vpack.c.b8 %v534, %v534
        %v536 = vpack.c.b16 %v526, %v526
        %v537 = vpack.c.b8 %v536, %v536
        %v538 = vpack.c.b16 %v527, %v527
        %v539 = vpack.c.b8 %v538, %v538
        %v540 = vpack.c.b16 %v528, %v528
        %v541 = vpack.c.b8 %v540, %v540
        %v542 = vpack.c.b16 %v529, %v529
        %v543 = vpack.c.b8 %v542, %v542
        %v544 = vpack.c.b16 %v530, %v530
        %v545 = vpack.c.b8 %v544, %v544
        %v546 = vpack.c.b16 %v531, %v531
        %v547 = vpack.c.b8 %v546, %v546
        %vm548 = vnez %v533
        %vm549 = vnez %v535
        %vm550 = vnez %v537
        %vm551 = vnez %v539
        %vm552 = vnez %v541
        %vm553 = vnez %v543
        %vm554 = vnez %v545
        %vm555 = vnez %v547
        %v556 = vsel %vm548, 16843009, 0
        %v557 = vsel %vm549, 16843009, 0
        %v558 = vsel %vm550, 16843009, 0
        %v559 = vsel %vm551, 16843009, 0
        %v560 = vsel %vm552, 16843009, 0
        %v561 = vsel %vm553, 16843009, 0
        %v562 = vsel %vm554, 16843009, 0
        %v563 = vsel %vm555, 16843009, 0
        %v564 = vunpack.c.0.s8 %v556
        %v565 = vunpack.c.0.s8 %v557
        %v566 = vunpack.c.0.s8 %v558
        %v567 = vunpack.c.0.s8 %v559
        %v568 = vunpack.c.0.s8 %v560
        %v569 = vunpack.c.0.s8 %v561
        %v570 = vunpack.c.0.s8 %v562
        %v571 = vunpack.c.0.s8 %v563
        %vm572 = vcmp.ne.s32.totalorder %v564, 0
        %vm573 = vcmp.ne.s32.totalorder %v565, 0
        %vm574 = vcmp.ne.s32.totalorder %v566, 0
        %vm575 = vcmp.ne.s32.totalorder %v567, 0
        %vm576 = vcmp.ne.s32.totalorder %v568, 0
        %vm577 = vcmp.ne.s32.totalorder %v569, 0
        %vm578 = vcmp.ne.s32.totalorder %v570, 0
        %vm579 = vcmp.ne.s32.totalorder %v571, 0
        %v580 = vsel %vm572, -inf, %v495
        %v581 = vsel %vm573, -inf, %v498
        %v582 = vsel %vm574, -inf, %v501
        %v583 = vsel %vm575, -inf, %v504
        %v584 = vsel %vm576, -inf, %v507
        %v585 = vsel %vm577, -inf, %v510
        %v586 = vsel %vm578, -inf, %v513
        %v587 = vsel %vm579, -inf, %v516
        %588 = vmax.xlane.f32.xlu0 %v580
        %v589 = vpop.xlane.xlu0 %588
        %590 = vmax.xlane.f32.xlu0 %v581
        %v591 = vpop.xlane.xlu0 %590
        %592 = vmax.xlane.f32.xlu0 %v582
        %v593 = vpop.xlane.xlu0 %592
        %594 = vmax.xlane.f32.xlu0 %v583
        %v595 = vpop.xlane.xlu0 %594
        %596 = vmax.xlane.f32.xlu0 %v584
        %v597 = vpop.xlane.xlu0 %596
        %598 = vmax.xlane.f32.xlu0 %v585
        %v599 = vpop.xlane.xlu0 %598
        %600 = vmax.xlane.f32.xlu0 %v586
        %v601 = vpop.xlane.xlu0 %600
        %602 = vmax.xlane.f32.xlu0 %v587
        %v603 = vpop.xlane.xlu0 %602
        %v604 = vsub.f32 %v580, %v589
        %v605 = vsub.f32 %v581, %v591
        %v606 = vsub.f32 %v582, %v593
        %v607 = vsub.f32 %v583, %v595
        %v608 = vsub.f32 %v584, %v597
        %v609 = vsub.f32 %v585, %v599
        %v610 = vsub.f32 %v586, %v601
        %v611 = vsub.f32 %v587, %v603
        %v612 = vmul.f32 %v604, 1.442695
        %v613 = vpow.pop %v612
        %v614 = vmul.f32 %v605, 1.442695
        %v615 = vpow.pop %v614
        %v616 = vmul.f32 %v606, 1.442695
        %v617 = vpow.pop %v616
        %v618 = vmul.f32 %v607, 1.442695
        %v619 = vpow.pop %v618
        %v620 = vmul.f32 %v608, 1.442695
        %v621 = vpow.pop %v620
        %v622 = vmul.f32 %v609, 1.442695
        %v623 = vpow.pop %v622
        %v624 = vmul.f32 %v610, 1.442695
        %v625 = vpow.pop %v624
        %v626 = vmul.f32 %v611, 1.442695
        %v627 = vpow.pop %v626
        %628 = vadd.xlane.f32.xlu0 %v613
        %v629 = vpop.xlane.xlu0 %628
        %630 = vadd.xlane.f32.xlu0 %v615
        %v631 = vpop.xlane.xlu0 %630
        %632 = vadd.xlane.f32.xlu0 %v617
        %v633 = vpop.xlane.xlu0 %632
        %634 = vadd.xlane.f32.xlu0 %v619
        %v635 = vpop.xlane.xlu0 %634
        %636 = vadd.xlane.f32.xlu0 %v621
        %v637 = vpop.xlane.xlu0 %636
        %638 = vadd.xlane.f32.xlu0 %v623
        %v639 = vpop.xlane.xlu0 %638
        %640 = vadd.xlane.f32.xlu0 %v625
        %v641 = vpop.xlane.xlu0 %640
        %642 = vadd.xlane.f32.xlu0 %v627
        %v643 = vpop.xlane.xlu0 %642
        %v644 = vrcp.pop %v629
        %v645 = vrcp.pop %v631
        %v646 = vrcp.pop %v633
        %v647 = vrcp.pop %v635
        %v648 = vrcp.pop %v637
        %v649 = vrcp.pop %v639
        %v650 = vrcp.pop %v641
        %v651 = vrcp.pop %v643
        %v652 = vmul.f32 %v629, %v644
        %v653 = vmul.f32 %v631, %v645
        %v654 = vmul.f32 %v633, %v646
        %v655 = vmul.f32 %v635, %v647
        %v656 = vmul.f32 %v637, %v648
        %v657 = vmul.f32 %v639, %v649
        %v658 = vmul.f32 %v641, %v650
        %v659 = vmul.f32 %v643, %v651
        %v660 = vsub.f32 2.0, %v652
        %v661 = vsub.f32 2.0, %v653
        %v662 = vsub.f32 2.0, %v654
        %v663 = vsub.f32 2.0, %v655
        %v664 = vsub.f32 2.0, %v656
        %v665 = vsub.f32 2.0, %v657
        %v666 = vsub.f32 2.0, %v658
        %v667 = vsub.f32 2.0, %v659
        %v668 = vmul.f32 %v644, %v660
        %v669 = vmul.f32 %v645, %v661
        %v670 = vmul.f32 %v646, %v662
        %v671 = vmul.f32 %v647, %v663
        %v672 = vmul.f32 %v648, %v664
        %v673 = vmul.f32 %v649, %v665
        %v674 = vmul.f32 %v650, %v666
        %v675 = vmul.f32 %v651, %v667
        %v676 = vmul.f32 %v613, %v668
        %v677 = vmul.f32 %v615, %v669
        %v678 = vmul.f32 %v617, %v670
        %v679 = vmul.f32 %v619, %v671
        %v680 = vmul.f32 %v621, %v672
        %v681 = vmul.f32 %v623, %v673
        %v682 = vmul.f32 %v625, %v674
        %v683 = vmul.f32 %v627, %v675
        %684 = vmatpush.msra.mxu0 %v395
        %685 = vmatpush.msra.mxu0 %v394
        %686 = vmatpush.msra.mxu0 %v393
        %687 = vmatpush.msra.mxu0 %v392
        %688 = vmatpush.msra.mxu0 %v391
        %689 = vmatpush.msra.mxu0 %v390
        %690 = vmatpush.msra.mxu0 %v389
        %691 = vmatpush.msra.mxu0 %v388
        %692 = vmatpush.msra.mxu0 %v387
        %693 = vmatpush.msra.mxu0 %v386
        %694 = vmatpush.msra.mxu0 %v385
        %695 = vmatpush.msra.mxu0 %v384
        %696 = vmatpush.msra.mxu0 %v383
        %697 = vmatpush.msra.mxu0 %v382
        %698 = vmatpush.msra.mxu0 %v381
        %699 = vmatpush.msra.mxu0 %v380
        %700 = vmatmul.f32.gmra.mxu0 %v676
        %v701 = vpop.f32.mrf.mxu0
        %v702 = vadd.f32 0.0, %v701
        %703 = vmatmul.f32.gmra.mxu0 %v677
        %v704 = vpop.f32.mrf.mxu0
        %v705 = vadd.f32 0.0, %v704
        %706 = vmatmul.f32.gmra.mxu0 %v678
        %v707 = vpop.f32.mrf.mxu0
        %v708 = vadd.f32 0.0, %v707
        %709 = vmatmul.f32.gmra.mxu0 %v679
        %v710 = vpop.f32.mrf.mxu0
        %v711 = vadd.f32 0.0, %v710
        %712 = vmatmul.f32.gmra.mxu0 %v680
        %v713 = vpop.f32.mrf.mxu0
        %v714 = vadd.f32 0.0, %v713
        %715 = vmatmul.f32.gmra.mxu0 %v681
        %v716 = vpop.f32.mrf.mxu0
        %v717 = vadd.f32 0.0, %v716
        %718 = vmatmul.f32.gmra.mxu0 %v682
        %v719 = vpop.f32.mrf.mxu0
        %v720 = vadd.f32 0.0, %v719
        %721 = vmatmul.f32.gmra.mxu0 %v683
        %v722 = vpop.f32.mrf.mxu0
        %v723 = vadd.f32 0.0, %v722
        %724 = vdwg.mxu0
        %725 = vst.msk [vmem:[%s351] sm:$0xff] %vm404, %v702
        %726 = vst.msk [vmem:[%s351 + $0x8] sm:$0xff] %vm404, %v705
        %727 = vst.msk [vmem:[%s351 + $0x10] sm:$0xff] %vm404, %v708
        %728 = vst.msk [vmem:[%s351 + $0x18] sm:$0xff] %vm404, %v711
        %729 = vst.msk [vmem:[%s351 + $0x20] sm:$0xff] %vm404, %v714
        %730 = vst.msk [vmem:[%s351 + $0x28] sm:$0xff] %vm404, %v717
        %731 = vst.msk [vmem:[%s351 + $0x30] sm:$0xff] %vm404, %v720
        %732 = vst.msk [vmem:[%s351 + $0x38] sm:$0xff] %vm404, %v723
        %733 = vst [vmem:[%s312] sm:$0xff] %v676
        %734 = vst [vmem:[%s312 + $0x8] sm:$0xff] %v677
        %735 = vst [vmem:[%s312 + $0x10] sm:$0xff] %v678
        %736 = vst [vmem:[%s312 + $0x18] sm:$0xff] %v679
        %737 = vst [vmem:[%s312 + $0x20] sm:$0xff] %v680
        %738 = vst [vmem:[%s312 + $0x28] sm:$0xff] %v681
        %739 = vst [vmem:[%s312 + $0x30] sm:$0xff] %v682
        %740 = vst [vmem:[%s312 + $0x38] sm:$0xff] %v683
        %s741 = smul.u32 8, %s25
        %p742 = scmp.lt.s32.totalorder %s24, 1
        %s743 = scalar_select %p742, %s24, 1
        %p744 = scmp.lt.s32.totalorder %s741, 15
        %s745 = scalar_select %p744, %s741, 15
        %s746 = smul.addr %s743, 16
        %s747 = sadd.s32 %s745, %s746
        %s748 = smul.addr %s747, 8
        %s749 = scalar_lea.vmem %s4, %s748
        %s750 = sand.u32 %s178, 1
        %s751 = scalar_lea.sflag [#allocation3], %s750
        %s752 = sand.u32 %s178, 1
        %s753 = smul.addr %s752, 64
        %s754 = scalar_lea.vmem [#allocation2], %s753
        // Predicated region
        $region37: #{tpu_custom_call.1} parent=35 // pred_check
          %p755 = pneg %p160
        $region38: #{tpu_custom_call.1} parent=35 // pred_check_branch
          %757 = sbr.rel (%p755) target = $region40
        $region39: #{tpu_custom_call.1} parent=35 // pred_region
          %s758 = smul.u32 8, %s25
        $region40: #{tpu_custom_call.1} parent=35 // pred_fallthru
          _
        // Predicated region
        $region41: #{tpu_custom_call.1} parent=35 // pred_check
          %p759 = pneg %p188
        $region42: #{tpu_custom_call.1} parent=35 // pred_check_branch
          %761 = sbr.rel (%p759) target = $region44
        $region43: #{tpu_custom_call.1} parent=35 // pred_region
          %s762 = smul.u32 8, %s25
          %764 = vsyncadd %s751, 0
          %s765 = smul.addr %s24, 16
          %s766 = sadd.s32 %s762, %s765
          %s767 = smul.addr %s766, 8
          %s768 = scalar_lea.hbm %s5, %s767
          %s769 = sshll.u32 %s754, 4
          %s770 = int_to_ptr.vmem [resolvable:$true] %s769
          %s771 = sshll.u32 %s768, 4
          %s772 = int_to_ptr.hbm [resolvable:$true] %s771
          %777 = dma.vmem_to_hbm [thread:$0]  %s770, 1024, %s772, %s751, 128, 128, 8
        $region44: #{tpu_custom_call.1} parent=35 // pred_fallthru
          _
      $region36: #{tpu_custom_call.1} parent=5 // pred_fallthru
        _
      %p778 = scmp.le.s32.totalorder 2, %s15
      // Predicated region
      $region45: #{tpu_custom_call.1} parent=5 // pred_check
        %p779 = pneg %p778
      $region46: #{tpu_custom_call.1} parent=5 // pred_check_branch
        %781 = sbr.rel (%p779) target = $region48
      $region47: #{tpu_custom_call.1} parent=5 // pred_region
        %s782 = ssub.s32 %s15, 2
        // Predicated region
        $region49: #{tpu_custom_call.1} parent=47 // pred_check
          %p783 = pneg %p166
        $region50: #{tpu_custom_call.1} parent=47 // pred_check_branch
          %785 = sbr.rel (%p783) target = $region52
        $region51: #{tpu_custom_call.1} parent=47 // pred_region
          %s786 = smul.u32 8, %s27
          %p787 = scmp.lt.s32.totalorder %s26, 1
          %s788 = scalar_select %p787, %s26, 1
          %p789 = scmp.lt.s32.totalorder %s786, 15
          %s790 = scalar_select %p789, %s786, 15
          %s791 = smul.addr %s788, 16
          %s792 = sadd.s32 %s790, %s791
          %s793 = smul.addr %s792, 8
          %s794 = scalar_lea.vmem %s4, %s793
        $region52: #{tpu_custom_call.1} parent=47 // pred_fallthru
          _
        // Predicated region
        $region53: #{tpu_custom_call.1} parent=47 // pred_check
          %p795 = pneg %p194
        $region54: #{tpu_custom_call.1} parent=47 // pred_check_branch
          %797 = sbr.rel (%p795) target = $region56
        $region55: #{tpu_custom_call.1} parent=47 // pred_region
          %s798 = sand.u32 %s179, 1
          %s799 = scalar_lea.sflag [#allocation3], %s798
          %s800 = sand.u32 %s179, 1
          %s801 = smul.addr %s800, 64
          %s802 = scalar_lea.vmem [#allocation2], %s801
          %804 = dma.done %s799, 1024
        $region56: #{tpu_custom_call.1} parent=47 // pred_fallthru
          _
      $region48: #{tpu_custom_call.1} parent=5 // pred_fallthru
        _
    $region6: #{tpu_custom_call.1} parent=1 // loop_footer
      %s19 = sadd.s32 1, %s15
    $region7: #{tpu_custom_call.1} parent=1 // loop_footer_branch
      %14 = sbr.rel target = $region3
    $region8: #{tpu_custom_call.1} parent=1 // loop_exit
      _
    %805 = vsyncpa [#allocation3], 1
    %s806 = scalar_lea.sflag [#allocation3], 1
    %807 = vsyncpa %s806, 1

</llo_original>
